<compile_context>
chip_gen: v5e
topology: v5e:2x2
jax: 0.10.0
libtpu: 0.0.40
codegen_flags: <defaults>
</compile_context>

<pallas_src>
import jax
import jax.numpy as jnp
from jax.experimental import pallas as pl
from jax.experimental.pallas import tpu as pltpu

LANE = 128
SUBLANE = 8


def _round_up(x, m):
    return ((x + m - 1) // m) * m


def _leaky_relu(x, slope=0.01):
    return jnp.where(x > 0, x, slope * x)


def _make_kernel(block_batch, num_nodes, offsets, s_pad):
    """Fused BNNet forward kernel (one batch tile per grid step).

    1. One-hot build (VPU, full vregs): onehot[b, offsets[n] + X[b, n]] = 1.
    2. Fused embed + adjacency-select + GNN-linear: onehot @ W_fold + bg,
       LeakyReLU (W_fold folds the embedding tables, the terminal-row-selected
       adjacency and the GNN linear layer; built in the wrapper).
    3. Two MLP matmuls.  All matmul operands bf16, accumulation f32,
       elementwise math f32, lane-padded -> unmasked stores.
    """

    def kernel(x_ref,      # (BT, N_pad)      int32   VMEM (batch tile of X)
               wfold_ref,  # (S_pad, TG_pad)  bf16    folded GNN stage
               bg_ref,     # (1, TG_pad)      f32
               w1_ref,     # (TG_pad, F1_pad) bf16
               b1_ref,     # (1, F1_pad)      f32
               w2_ref,     # (F1_pad, C_pad)  bf16
               b2_ref,     # (1, C_pad)       f32
               out_ref):   # (BT, C_pad)      f32
        # ---- 1. one-hot state-selection matrix -------------------------------
        x = x_ref[...]                                            # (BT, N_pad)
        col = jax.lax.broadcasted_iota(jnp.int32, (block_batch, s_pad), 1)
        onehot = jnp.zeros((block_batch, s_pad), jnp.float32)
        for n in range(num_nodes):                                # small, unrolled
            gid = x[:, n:n + 1] + offsets[n]                      # (BT, 1)
            onehot = onehot + (col == gid).astype(jnp.float32)

        # ---- 2. fused (embeddings x terminal-adjacency x GNN linear) ---------
        flat = jnp.dot(onehot.astype(jnp.bfloat16), wfold_ref[...],
                       preferred_element_type=jnp.float32) + bg_ref[...]
        flat = _leaky_relu(flat)                                  # (BT, TG_pad) f32

        # ---- 3. MLP -----------------------------------------------------------
        z1 = jnp.dot(flat.astype(jnp.bfloat16), w1_ref[...],
                     preferred_element_type=jnp.float32) + b1_ref[...]
        z1 = _leaky_relu(z1)
        out_ref[...] = jnp.dot(z1.astype(jnp.bfloat16), w2_ref[...],
                               preferred_element_type=jnp.float32) + b2_ref[...]

    return kernel


def build_adjacency(edge_index, num_nodes):
    """Dense adjacency with self loops, row-normalised (message passing op)."""
    src = jnp.asarray(edge_index[0], dtype=jnp.int32)
    dst = jnp.asarray(edge_index[1], dtype=jnp.int32)
    a = jnp.zeros((num_nodes, num_nodes), jnp.float32)
    a = a.at[dst, src].set(1.0)                       # messages flow src -> dst
    a = a + jnp.eye(num_nodes, dtype=jnp.float32)     # self loops
    deg = jnp.sum(a, axis=1, keepdims=True)
    return a / jnp.maximum(deg, 1.0)


def bnnet_forward(X, params, adjacency, terminal_node_ids, config, num_classes):
    """Wrapper: constant folding + padding, then one fused Pallas kernel call."""
    batch, num_nodes = X.shape
    E = config["embedding_dim"]
    G = config["gnn_out_dim"]
    F1 = config["fc1_out_dim"]
    T = len(terminal_node_ids)

    NE, TG = num_nodes * E, T * G
    TG_pad = _round_up(TG, LANE)
    F1_pad = _round_up(F1, LANE)
    C_pad = _round_up(num_classes, LANE)

    # Batch tile: up to 256 rows (fills MXU rows on v5e/v6e/v7x), clamped to
    # the (8-rounded) batch so tiny batches don't pad wastefully.
    BT = min(256, _round_up(batch, SUBLANE))
    B_pad = _round_up(batch, BT)

    # ---- positioned embedding table (wrapper-side only, tiny constant) -------
    offsets, rows, off = [], [], 0
    for n, tbl in enumerate(params["embeddings"]):
        tbl = tbl.astype(jnp.float32)
        s_n = tbl.shape[0]
        pos = jnp.zeros((s_n, NE), jnp.float32).at[:, n * E:(n + 1) * E].set(tbl)
        rows.append(pos)
        offsets.append(off)
        off += s_n
    emb_pos = jnp.concatenate(rows, axis=0)            # (S_total, NE)
    s_total = off
    S_pad = _round_up(s_total, LANE)

    # ---- fold terminal-row selection + GNN linear + embeddings ---------------
    a_sel = adjacency[jnp.asarray(terminal_node_ids, dtype=jnp.int32), :]  # (T, N)
    wgnn = jnp.kron(a_sel.T, params["wg"].astype(jnp.float32))             # (NE, TG)
    wfold = emb_pos @ wgnn                                                 # (S_total, TG)
    wfold_p = (jnp.zeros((S_pad, TG_pad), jnp.float32)
               .at[:s_total, :TG].set(wfold)).astype(jnp.bfloat16)

    bg_t = jnp.tile(params["bg"].reshape(1, G).astype(jnp.float32), (1, T))
    bg_p = jnp.zeros((1, TG_pad), jnp.float32).at[:, :TG].set(bg_t)

    # ---- lane-pad the MLP weights (padded lanes stay exactly zero) -----------
    w1_p = (jnp.zeros((TG_pad, F1_pad), jnp.float32)
            .at[:TG, :F1].set(params["w1"].astype(jnp.float32))).astype(jnp.bfloat16)
    b1_p = jnp.zeros((1, F1_pad), jnp.float32).at[:, :F1].set(
        params["b1"].reshape(1, F1).astype(jnp.float32))
    w2_p = (jnp.zeros((F1_pad, C_pad), jnp.float32)
            .at[:F1, :num_classes].set(params["w2"].astype(jnp.float32))
            ).astype(jnp.bfloat16)
    b2_p = jnp.zeros((1, C_pad), jnp.float32).at[:, :num_classes].set(
        params["b2"].reshape(1, num_classes).astype(jnp.float32))

    # ---- batch/lane padding of X (index 0 is valid for every node's table;
    #      padded columns are never read in the kernel) -------------------------
    N_pad = _round_up(num_nodes, LANE)
    x_pad = jnp.zeros((B_pad, N_pad), jnp.int32).at[:batch, :num_nodes].set(
        X.astype(jnp.int32))

    kernel = _make_kernel(BT, num_nodes, tuple(offsets), S_pad)

    def _const(shape):
        return pl.BlockSpec(shape, lambda i: (0, 0))

    # Explicit scoped-VMEM budget: defaults are 16 MiB (v5e) / 32 MiB (v6e,v7x)
    # even though physical is 128/128/64 MiB; x2 for default double-buffering
    # of every operand plus headroom, clamped to v7x's 64 MiB physical.
    # TODO(synk): if W_fold/w1 ever exceed this, add a reduction grid axis
    # with an f32 accumulator instead of holding the weights whole.
    def _nbytes(shape, itemsize):
        n = 1
        for s in shape:
            n *= s
        return n * itemsize

    resident = (_nbytes((S_pad, TG_pad), 2) + _nbytes((TG_pad, F1_pad), 2)
                + _nbytes((F1_pad, C_pad), 2) + _nbytes((1, TG_pad), 4)
                + _nbytes((1, F1_pad), 4) + _nbytes((1, C_pad), 4)
                + _nbytes((BT, N_pad), 4) + _nbytes((BT, C_pad), 4))
    vmem_limit = int(min(max(2 * resident + (8 << 20), 32 << 20), 64 << 20))

    out = pl.pallas_call(
        kernel,
        out_shape=jax.ShapeDtypeStruct((B_pad, C_pad), jnp.float32),
        grid=(B_pad // BT,),
        in_specs=[
            pl.BlockSpec((BT, N_pad), lambda i: (i, 0)),      # X batch tile
            _const((S_pad, TG_pad)),                          # W_fold (bf16)
            _const((1, TG_pad)),                              # bg tiled (f32)
            _const((TG_pad, F1_pad)),                         # w1 (bf16)
            _const((1, F1_pad)),                              # b1 (f32)
            _const((F1_pad, C_pad)),                          # w2 (bf16)
            _const((1, C_pad)),                               # b2 (f32)
        ],
        out_specs=pl.BlockSpec((BT, C_pad), lambda i: (i, 0)),
        compiler_params=pltpu.CompilerParams(
            dimension_semantics=("parallel",),
            vmem_limit_bytes=vmem_limit),
    )(x_pad, wfold_p, bg_p, w1_p, b1_p, w2_p, b2_p)

    return out[:batch, :num_classes]


def bnnet_reference(X, params, adjacency, terminal_node_ids, config):
    """Pure-JAX f32 reference (unpadded, straightforward order of ops)."""
    cols = [table[X[:, i]] for i, table in enumerate(params["embeddings"])]
    h = jnp.stack(cols, axis=1).astype(jnp.float32)            # (B, N, E)
    agg = jnp.einsum("nm,bme->bne", adjacency, h)
    g = _leaky_relu(jnp.einsum("bne,eg->bng", agg, params["wg"]) + params["bg"])
    sel = g[:, jnp.asarray(terminal_node_ids), :]               # (B, T, G)
    flat = sel.reshape(sel.shape[0], -1)
    z1 = _leaky_relu(flat @ params["w1"] + params["b1"])
    return z1 @ params["w2"] + params["b2"]


if __name__ == "__main__":
    # ---- small, deterministic problem setup ---------------------------------
    config = {"embedding_dim": 8, "gnn_out_dim": 16, "fc1_out_dim": 32}
    num_nodes = 4
    node_states = [["a", "b", "c"], ["a", "b"], ["a", "b", "c", "d"], ["a", "b", "c"]]
    edge_index = [[0, 1, 2, 0], [1, 2, 3, 3]]          # coo: src row, dst row
    terminal_node_ids = [2, 3]
    target_node_states = ["low", "mid", "high"]        # 3 prediction classes
    num_classes = len(target_node_states)
    batch = 2

    E = config["embedding_dim"]
    G = config["gnn_out_dim"]
    F1 = config["fc1_out_dim"]
    T = len(terminal_node_ids)

    key = jax.random.PRNGKey(0)
    keys = jax.random.split(key, 16)

    embeddings = []
    for i, states in enumerate(node_states):
        embeddings.append(
            jax.random.normal(keys[i], (len(states), E), jnp.float32))

    params = {
        "embeddings": embeddings,
        "wg": jax.random.normal(keys[8], (E, G), jnp.float32) / jnp.sqrt(E),
        "bg": jax.random.normal(keys[9], (1, G), jnp.float32) * 0.01,
        "w1": jax.random.normal(keys[10], (T * G, F1), jnp.float32) / jnp.sqrt(T * G),
        "b1": jax.random.normal(keys[11], (1, F1), jnp.float32) * 0.01,
        "w2": jax.random.normal(keys[12], (F1, num_classes), jnp.float32) / jnp.sqrt(F1),
        "b2": jax.random.normal(keys[13], (1, num_classes), jnp.float32) * 0.01,
    }

    adjacency = build_adjacency(edge_index, num_nodes)

    maxes = jnp.asarray([len(s) for s in node_states], dtype=jnp.int32)
    X = (jax.random.randint(keys[14], (batch, num_nodes), 0, 1_000_000,
                            dtype=jnp.int32) % maxes).astype(jnp.int32)

    out = bnnet_forward(X, params, adjacency, terminal_node_ids, config,
                        num_classes)
    out = jax.block_until_ready(out)

    ref = bnnet_reference(X, params, adjacency, terminal_node_ids, config)
    assert out.shape == (batch, num_classes)
    # Looser tolerance than rev 2: matmul operands are bf16 (f32 accumulation).
    assert jnp.allclose(out, ref, atol=5e-2, rtol=5e-2), (out, ref)

    print("KERNEL_OK")
</pallas_src>

<mosaic_0001>
module attributes {stable_mosaic.version = 11 : i64} {
  func.func @kernel(%arg0: i32, %arg1: memref<8x128xi32, #tpu.memory_space<vmem>>, %arg2: memref<128x128xbf16, #tpu.memory_space<vmem>>, %arg3: memref<1x128xf32, #tpu.memory_space<vmem>>, %arg4: memref<128x128xbf16, #tpu.memory_space<vmem>>, %arg5: memref<1x128xf32, #tpu.memory_space<vmem>>, %arg6: memref<128x128xbf16, #tpu.memory_space<vmem>>, %arg7: memref<1x128xf32, #tpu.memory_space<vmem>>, %arg8: memref<8x128xf32, #tpu.memory_space<vmem>>) attributes {dimension_semantics = [#tpu.dimension_semantics<parallel>], iteration_bounds = array<i64: 1>, scalar_prefetch = 0 : i64, scratch_operands = 0 : i64, tpu.core_type = #tpu.core_type<tc>, window_params = [{transform_indices = @transform_0, window_bounds = array<i64: 8, 128>}, {pipeline_mode = #tpu.pipeline_mode<synchronous>, transform_indices = @transform_1, window_bounds = array<i64: 128, 128>}, {pipeline_mode = #tpu.pipeline_mode<synchronous>, transform_indices = @transform_2, window_bounds = array<i64: 1, 128>}, {pipeline_mode = #tpu.pipeline_mode<synchronous>, transform_indices = @transform_3, window_bounds = array<i64: 128, 128>}, {pipeline_mode = #tpu.pipeline_mode<synchronous>, transform_indices = @transform_4, window_bounds = array<i64: 1, 128>}, {pipeline_mode = #tpu.pipeline_mode<synchronous>, transform_indices = @transform_5, window_bounds = array<i64: 128, 128>}, {pipeline_mode = #tpu.pipeline_mode<synchronous>, transform_indices = @transform_6, window_bounds = array<i64: 1, 128>}, {transform_indices = @transform_7, window_bounds = array<i64: 8, 128>}]} {
    %c0 = arith.constant 0 : index
    %c0_0 = arith.constant 0 : index
    %0 = vector.load %arg1[%c0, %c0_0] : memref<8x128xi32, #tpu.memory_space<vmem>>, vector<8x128xi32>
    %1 = tpu.iota {dimensions = array<i32: 1>} : vector<8x128xi32>
    %cst = arith.constant 0.000000e+00 : f32
    %2 = vector.broadcast %cst : f32 to vector<8x128xf32>
    %3 = vector.extract_strided_slice %0 {offsets = [0, 0], sizes = [8, 1], strides = [1, 1]} : vector<8x128xi32> to vector<8x1xi32>
    %c0_i32 = arith.constant 0 : i32
    %4 = vector.broadcast %c0_i32 : i32 to vector<8x1xi32>
    %5 = arith.addi %3, %4 : vector<8x1xi32>
    %6 = vector.broadcast %5 : vector<8x1xi32> to vector<8x128xi32>
    %7 = arith.cmpi eq, %1, %6 : vector<8x128xi32>
    %8 = arith.extui %7 : vector<8x128xi1> to vector<8x128xi32>
    %9 = arith.sitofp %8 : vector<8x128xi32> to vector<8x128xf32>
    %10 = arith.addf %2, %9 : vector<8x128xf32>
    %11 = vector.extract_strided_slice %0 {offsets = [0, 1], sizes = [8, 1], strides = [1, 1]} : vector<8x128xi32> to vector<8x1xi32>
    %c3_i32 = arith.constant 3 : i32
    %12 = vector.broadcast %c3_i32 : i32 to vector<8x1xi32>
    %13 = arith.addi %11, %12 : vector<8x1xi32>
    %14 = vector.broadcast %13 : vector<8x1xi32> to vector<8x128xi32>
    %15 = arith.cmpi eq, %1, %14 : vector<8x128xi32>
    %16 = arith.extui %15 : vector<8x128xi1> to vector<8x128xi32>
    %17 = arith.sitofp %16 : vector<8x128xi32> to vector<8x128xf32>
    %18 = arith.addf %10, %17 : vector<8x128xf32>
    %19 = vector.extract_strided_slice %0 {offsets = [0, 2], sizes = [8, 1], strides = [1, 1]} : vector<8x128xi32> to vector<8x1xi32>
    %c5_i32 = arith.constant 5 : i32
    %20 = vector.broadcast %c5_i32 : i32 to vector<8x1xi32>
    %21 = arith.addi %19, %20 : vector<8x1xi32>
    %22 = vector.broadcast %21 : vector<8x1xi32> to vector<8x128xi32>
    %23 = arith.cmpi eq, %1, %22 : vector<8x128xi32>
    %24 = arith.extui %23 : vector<8x128xi1> to vector<8x128xi32>
    %25 = arith.sitofp %24 : vector<8x128xi32> to vector<8x128xf32>
    %26 = arith.addf %18, %25 : vector<8x128xf32>
    %27 = vector.extract_strided_slice %0 {offsets = [0, 3], sizes = [8, 1], strides = [1, 1]} : vector<8x128xi32> to vector<8x1xi32>
    %c9_i32 = arith.constant 9 : i32
    %28 = vector.broadcast %c9_i32 : i32 to vector<8x1xi32>
    %29 = arith.addi %27, %28 : vector<8x1xi32>
    %30 = vector.broadcast %29 : vector<8x1xi32> to vector<8x128xi32>
    %31 = arith.cmpi eq, %1, %30 : vector<8x128xi32>
    %32 = arith.extui %31 : vector<8x128xi1> to vector<8x128xi32>
    %33 = arith.sitofp %32 : vector<8x128xi32> to vector<8x128xf32>
    %34 = arith.addf %26, %33 : vector<8x128xf32>
    %35 = arith.truncf %34 : vector<8x128xf32> to vector<8x128xbf16>
    %c0_1 = arith.constant 0 : index
    %c0_2 = arith.constant 0 : index
    %36 = vector.load %arg2[%c0_1, %c0_2] : memref<128x128xbf16, #tpu.memory_space<vmem>>, vector<128x128xbf16>
    %cst_3 = arith.constant dense<0.000000e+00> : vector<8x128xf32>
    %37 = tpu.matmul %35, %36, %cst_3 {dimension_numbers = #tpu.dot_dimension_numbers<[1], [0], [0], [1], [0, 0, 1, 1], [], []>} : vector<8x128xbf16>, vector<128x128xbf16>, vector<8x128xf32> -> vector<8x128xf32>
    %c0_4 = arith.constant 0 : index
    %c0_5 = arith.constant 0 : index
    %38 = vector.load %arg3[%c0_4, %c0_5] : memref<1x128xf32, #tpu.memory_space<vmem>>, vector<1x128xf32>
    %39 = vector.broadcast %38 : vector<1x128xf32> to vector<8x128xf32>
    %40 = arith.addf %37, %39 : vector<8x128xf32>
    %cst_6 = arith.constant 0.000000e+00 : f32
    %41 = vector.broadcast %cst_6 : f32 to vector<8x128xf32>
    %42 = arith.cmpf ogt, %40, %41 : vector<8x128xf32>
    %cst_7 = arith.constant 0.00999999977 : f32
    %43 = vector.broadcast %cst_7 : f32 to vector<8x128xf32>
    %44 = arith.mulf %43, %40 : vector<8x128xf32>
    %45 = arith.select %42, %40, %44 : vector<8x128xi1>, vector<8x128xf32>
    %46 = arith.truncf %45 : vector<8x128xf32> to vector<8x128xbf16>
    %c0_8 = arith.constant 0 : index
    %c0_9 = arith.constant 0 : index
    %47 = vector.load %arg4[%c0_8, %c0_9] : memref<128x128xbf16, #tpu.memory_space<vmem>>, vector<128x128xbf16>
    %cst_10 = arith.constant dense<0.000000e+00> : vector<8x128xf32>
    %48 = tpu.matmul %46, %47, %cst_10 {dimension_numbers = #tpu.dot_dimension_numbers<[1], [0], [0], [1], [0, 0, 1, 1], [], []>} : vector<8x128xbf16>, vector<128x128xbf16>, vector<8x128xf32> -> vector<8x128xf32>
    %c0_11 = arith.constant 0 : index
    %c0_12 = arith.constant 0 : index
    %49 = vector.load %arg5[%c0_11, %c0_12] : memref<1x128xf32, #tpu.memory_space<vmem>>, vector<1x128xf32>
    %50 = vector.broadcast %49 : vector<1x128xf32> to vector<8x128xf32>
    %51 = arith.addf %48, %50 : vector<8x128xf32>
    %cst_13 = arith.constant 0.000000e+00 : f32
    %52 = vector.broadcast %cst_13 : f32 to vector<8x128xf32>
    %53 = arith.cmpf ogt, %51, %52 : vector<8x128xf32>
    %cst_14 = arith.constant 0.00999999977 : f32
    %54 = vector.broadcast %cst_14 : f32 to vector<8x128xf32>
    %55 = arith.mulf %54, %51 : vector<8x128xf32>
    %56 = arith.select %53, %51, %55 : vector<8x128xi1>, vector<8x128xf32>
    %57 = arith.truncf %56 : vector<8x128xf32> to vector<8x128xbf16>
    %c0_15 = arith.constant 0 : index
    %c0_16 = arith.constant 0 : index
    %58 = vector.load %arg6[%c0_15, %c0_16] : memref<128x128xbf16, #tpu.memory_space<vmem>>, vector<128x128xbf16>
    %cst_17 = arith.constant dense<0.000000e+00> : vector<8x128xf32>
    %59 = tpu.matmul %57, %58, %cst_17 {dimension_numbers = #tpu.dot_dimension_numbers<[1], [0], [0], [1], [0, 0, 1, 1], [], []>} : vector<8x128xbf16>, vector<128x128xbf16>, vector<8x128xf32> -> vector<8x128xf32>
    %c0_18 = arith.constant 0 : index
    %c0_19 = arith.constant 0 : index
    %60 = vector.load %arg7[%c0_18, %c0_19] : memref<1x128xf32, #tpu.memory_space<vmem>>, vector<1x128xf32>
    %61 = vector.broadcast %60 : vector<1x128xf32> to vector<8x128xf32>
    %62 = arith.addf %59, %61 : vector<8x128xf32>
    %c0_20 = arith.constant 0 : index
    %c0_21 = arith.constant 0 : index
    %63 = vector.load %arg8[%c0_20, %c0_21] : memref<8x128xf32, #tpu.memory_space<vmem>>, vector<8x128xf32>
    tpu.vector_store %arg8[%c0_20, %c0_21], %62 {strides = array<i32>} : memref<8x128xf32, #tpu.memory_space<vmem>>, vector<8x128xf32>,
    return
  }
  func.func @transform_0(%arg0: i32) -> (i32, i32) {
    %c0_i32 = arith.constant 0 : i32
    %c0_i32_0 = arith.constant 0 : i32
    return %arg0, %c0_i32 : i32, i32
  }
  func.func @transform_1(%arg0: i32) -> (i32, i32) {
    %c0_i32 = arith.constant 0 : i32
    %c0_i32_0 = arith.constant 0 : i32
    %c0_i32_1 = arith.constant 0 : i32
    return %c0_i32, %c0_i32_0 : i32, i32
  }
  func.func @transform_2(%arg0: i32) -> (i32, i32) {
    %c0_i32 = arith.constant 0 : i32
    %c0_i32_0 = arith.constant 0 : i32
    %c0_i32_1 = arith.constant 0 : i32
    return %c0_i32, %c0_i32_0 : i32, i32
  }
  func.func @transform_3(%arg0: i32) -> (i32, i32) {
    %c0_i32 = arith.constant 0 : i32
    %c0_i32_0 = arith.constant 0 : i32
    %c0_i32_1 = arith.constant 0 : i32
    return %c0_i32, %c0_i32_0 : i32, i32
  }
  func.func @transform_4(%arg0: i32) -> (i32, i32) {
    %c0_i32 = arith.constant 0 : i32
    %c0_i32_0 = arith.constant 0 : i32
    %c0_i32_1 = arith.constant 0 : i32
    return %c0_i32, %c0_i32_0 : i32, i32
  }
  func.func @transform_5(%arg0: i32) -> (i32, i32) {
    %c0_i32 = arith.constant 0 : i32
    %c0_i32_0 = arith.constant 0 : i32
    %c0_i32_1 = arith.constant 0 : i32
    return %c0_i32, %c0_i32_0 : i32, i32
  }
  func.func @transform_6(%arg0: i32) -> (i32, i32) {
    %c0_i32 = arith.constant 0 : i32
    %c0_i32_0 = arith.constant 0 : i32
    %c0_i32_1 = arith.constant 0 : i32
    return %c0_i32, %c0_i32_0 : i32, i32
  }
  func.func @transform_7(%arg0: i32) -> (i32, i32) {
    %c0_i32 = arith.constant 0 : i32
    %c0_i32_0 = arith.constant 0 : i32
    return %arg0, %c0_i32 : i32, i32
  }
}

</mosaic_0001>

<llo_original>
// kernel: tpu_custom_call.1
$region0: #{tpu_custom_call.1}
  #allocation0 [shape = 'u32[]', space=smem, size = 0x4, offset = 0x4, fixed_abs, tag = 'smem constant byte address 0x4 - core index']
  #allocation1 [shape = 'u32[72,128]{1,0:T(1,128)}', space=vmem, size = 0x9000, scoped, tag = 'internal scratch']
  %s0 = inlined_call_operand.hbm [shape: s32[8,128], index: 0, kind: input, shape index: {}]
  %s1 = inlined_call_operand.hbm [shape: bf16[128,128], index: 1, kind: input, shape index: {}]
  %s2 = inlined_call_operand.vmem [shape: f32[1,128], index: 2, kind: input, shape index: {}]
  %s3 = inlined_call_operand.hbm [shape: bf16[128,128], index: 3, kind: input, shape index: {}]
  %s4 = inlined_call_operand.vmem [shape: f32[1,128], index: 4, kind: input, shape index: {}]
  %s5 = inlined_call_operand.hbm [shape: bf16[128,128], index: 5, kind: input, shape index: {}]
  %s6 = inlined_call_operand.vmem [shape: f32[1,128], index: 6, kind: input, shape index: {}]
  %s7 = inlined_call_operand.hbm [shape: f32[8,128], index: 7, kind: output, shape index: {}]
  %s8 = sld [smem:[#allocation0]]
  $region54: #{tpu_custom_call.1} parent=0
    _
  %s10 = ssub.s32 1, %s8
  %s11 = scalar_select 0, %s10, %s8
  $region1: #{tpu_custom_call.1} parent=0
    #allocation2 [shape = 'u8[4096]{0}', space=vmem, size = 0x1000, scoped, tag = 'input window, operand 0, single buffered']
    #allocation3 [shape = 's32[1]{0}', space=sflag, size = 0x4, scoped, tag = 'scoped memory for tpu_custom_call.1']
    #allocation4 [shape = 's32[1]{0}', space=sflag, size = 0x4, scoped, tag = 'scoped memory for tpu_custom_call.1']
    #allocation5 [shape = 'u8[32768]{0}', space=vmem, size = 0x8000, scoped, tag = 'input window, operand 1, single buffered']
    #allocation6 [shape = 's32[1]{0}', space=sflag, size = 0x4, scoped, tag = 'scoped memory for tpu_custom_call.1']
    #allocation7 [shape = 'u8[32768]{0}', space=vmem, size = 0x8000, scoped, tag = 'input window, operand 3, single buffered']
    #allocation8 [shape = 'u8[32768]{0}', space=vmem, size = 0x8000, scoped, tag = 'input window, operand 5, single buffered']
    #allocation9 [shape = 's32[1]{0}', space=sflag, size = 0x4, scoped, tag = 'scoped memory for tpu_custom_call.1']
    #allocation10 [shape = 'u8[4096]{0}', space=vmem, size = 0x1000, scoped, tag = 'output window, operand 0, single buffered']
    %12 = vsyncpa [#allocation3], 0
    %13 = vsyncpa [#allocation6], 0
    %14 = vsyncpa [#allocation9], 0
    %15 = vsyncpa [#allocation4], 0
    // Predicated region
    $region2: #{tpu_custom_call.1} parent=1 // pred_check
      _
    $region3: #{tpu_custom_call.1} parent=1 // pred_check_branch
      %17 = sbr.rel (0) target = $region5
    $region4: #{tpu_custom_call.1} parent=1 // pred_region
      %19 = vsyncadd [#allocation3], 0
      %s21 = sshll.u32 %s0, 4
      %s22 = int_to_ptr.hbm [resolvable:$true] %s21
      %s23 = sshll.u32 [#allocation2], 4
      %s24 = int_to_ptr.vmem [resolvable:$true] %s23
      %26 = dma.hbm_to_vmem [thread:$0]  %s22, 128, %s24, [#allocation3]
    $region5: #{tpu_custom_call.1} parent=1 // pred_fallthru
      _
    // Predicated region
    $region6: #{tpu_custom_call.1} parent=1 // pred_check
      _
    $region7: #{tpu_custom_call.1} parent=1 // pred_check_branch
      %28 = sbr.rel (0) target = $region9
    $region8: #{tpu_custom_call.1} parent=1 // pred_region
      %30 = vsyncadd [#allocation6], 0
      %s31 = sshll.u32 %s1, 4
      %s32 = int_to_ptr.hbm [resolvable:$true] %s31
      %s33 = sshll.u32 [#allocation5], 4
      %s34 = int_to_ptr.vmem [resolvable:$true] %s33
      %39 = dma.hbm_to_vmem [thread:$0]  %s32, 1024, %s34, [#allocation6], 64, 64, 4
    $region9: #{tpu_custom_call.1} parent=1 // pred_fallthru
      _
    // Predicated region
    $region10: #{tpu_custom_call.1} parent=1 // pred_check
      _
    $region11: #{tpu_custom_call.1} parent=1 // pred_check_branch
      %41 = sbr.rel (0) target = $region13
    $region12: #{tpu_custom_call.1} parent=1 // pred_region
      _
    $region13: #{tpu_custom_call.1} parent=1 // pred_fallthru
      _
    // Predicated region
    $region14: #{tpu_custom_call.1} parent=1 // pred_check
      _
    $region15: #{tpu_custom_call.1} parent=1 // pred_check_branch
      %43 = sbr.rel (0) target = $region17
    $region16: #{tpu_custom_call.1} parent=1 // pred_region
      %45 = vsyncadd [#allocation6], 0
      %s46 = sshll.u32 %s3, 4
      %s47 = int_to_ptr.hbm [resolvable:$true] %s46
      %s48 = sshll.u32 [#allocation7], 4
      %s49 = int_to_ptr.vmem [resolvable:$true] %s48
      %54 = dma.hbm_to_vmem [thread:$0]  %s47, 1024, %s49, [#allocation6], 64, 64, 4
    $region17: #{tpu_custom_call.1} parent=1 // pred_fallthru
      _
    // Predicated region
    $region18: #{tpu_custom_call.1} parent=1 // pred_check
      _
    $region19: #{tpu_custom_call.1} parent=1 // pred_check_branch
      %56 = sbr.rel (0) target = $region21
    $region20: #{tpu_custom_call.1} parent=1 // pred_region
      _
    $region21: #{tpu_custom_call.1} parent=1 // pred_fallthru
      _
    // Predicated region
    $region22: #{tpu_custom_call.1} parent=1 // pred_check
      _
    $region23: #{tpu_custom_call.1} parent=1 // pred_check_branch
      %58 = sbr.rel (0) target = $region25
    $region24: #{tpu_custom_call.1} parent=1 // pred_region
      %60 = vsyncadd [#allocation9], 0
      %s61 = sshll.u32 %s5, 4
      %s62 = int_to_ptr.hbm [resolvable:$true] %s61
      %s63 = sshll.u32 [#allocation8], 4
      %s64 = int_to_ptr.vmem [resolvable:$true] %s63
      %69 = dma.hbm_to_vmem [thread:$0]  %s62, 1024, %s64, [#allocation9], 64, 64, 4
    $region25: #{tpu_custom_call.1} parent=1 // pred_fallthru
      _
    // Predicated region
    $region26: #{tpu_custom_call.1} parent=1 // pred_check
      _
    $region27: #{tpu_custom_call.1} parent=1 // pred_check_branch
      %71 = sbr.rel (0) target = $region29
    $region28: #{tpu_custom_call.1} parent=1 // pred_region
      _
    $region29: #{tpu_custom_call.1} parent=1 // pred_fallthru
      _
    // Predicated region
    $region30: #{tpu_custom_call.1} parent=1 // pred_check
      _
    $region31: #{tpu_custom_call.1} parent=1 // pred_check_branch
      %73 = sbr.rel (0) target = $region33
    $region32: #{tpu_custom_call.1} parent=1 // pred_region
      %75 = dma.done [#allocation3], 128
    $region33: #{tpu_custom_call.1} parent=1 // pred_fallthru
      _
    // Predicated region
    $region34: #{tpu_custom_call.1} parent=1 // pred_check
      _
    $region35: #{tpu_custom_call.1} parent=1 // pred_check_branch
      %77 = sbr.rel (0) target = $region37
    $region36: #{tpu_custom_call.1} parent=1 // pred_region
      %79 = dma.done [#allocation6], 1024
    $region37: #{tpu_custom_call.1} parent=1 // pred_fallthru
      _
    // Predicated region
    $region38: #{tpu_custom_call.1} parent=1 // pred_check
      _
    $region39: #{tpu_custom_call.1} parent=1 // pred_check_branch
      %81 = sbr.rel (0) target = $region41
    $region40: #{tpu_custom_call.1} parent=1 // pred_region
      %83 = dma.done [#allocation6], 1024
    $region41: #{tpu_custom_call.1} parent=1 // pred_fallthru
      _
    // Predicated region
    $region42: #{tpu_custom_call.1} parent=1 // pred_check
      _
    $region43: #{tpu_custom_call.1} parent=1 // pred_check_branch
      %85 = sbr.rel (0) target = $region45
    $region44: #{tpu_custom_call.1} parent=1 // pred_region
      %87 = dma.done [#allocation9], 1024
    $region45: #{tpu_custom_call.1} parent=1 // pred_fallthru
      _
    %v88 = vld [vmem:[#allocation2] sm:$0xff]
    %v89 = vlaneseq
    %v90 = vand.u32 %v89, 127
    %91 = vset.pattern.permute.xlu0 0
    %92 = vperm.xlu0 %91, %v88
    %v93 = vpop.permute.xlu0 %92
    %vm94 = vcmp.eq.s32.totalorder %v90, %v93
    %v95 = vsel %vm94, 1, 0
    %v96 = vcvt.s32.f32 %v95
    %v97 = vadd.f32 %v96, 0.0
    %v98 = vadd.s32 %v88, 3
    %99 = vset.pattern.permute.xlu0 1
    %100 = vperm.xlu0 %99, %v98
    %v101 = vpop.permute.xlu0 %100
    %vm102 = vcmp.eq.s32.totalorder %v90, %v101
    %v103 = vsel %vm102, 1, 0
    %v104 = vcvt.s32.f32 %v103
    %v105 = vadd.f32 %v97, %v104
    %v106 = vadd.s32 %v88, 5
    %107 = vset.pattern.permute.xlu0 2
    %108 = vperm.xlu0 %107, %v106
    %v109 = vpop.permute.xlu0 %108
    %vm110 = vcmp.eq.s32.totalorder %v90, %v109
    %v111 = vsel %vm110, 1, 0
    %v112 = vcvt.s32.f32 %v111
    %v113 = vadd.f32 %v105, %v112
    %v114 = vadd.s32 %v88, 9
    %115 = vset.pattern.permute.xlu0 3
    %116 = vperm.xlu0 %115, %v114
    %v117 = vpop.permute.xlu0 %116
    %vm118 = vcmp.eq.s32.totalorder %v90, %v117
    %v119 = vsel %vm118, 1, 0
    %v120 = vcvt.s32.f32 %v119
    %v121 = vadd.f32 %v113, %v120
    %v122 = vpack.c.bf16 %v121, %v121
    %v123 = vld [vmem:[#allocation5] sm:$0xf]
    %v124 = vld [vmem:[#allocation5 + $0x4] sm:$0xf]
    %v125 = vld [vmem:[#allocation5 + $0x8] sm:$0xf]
    %v126 = vld [vmem:[#allocation5 + $0xc] sm:$0xf]
    %v127 = vld [vmem:[#allocation5 + $0x10] sm:$0xf]
    %v128 = vld [vmem:[#allocation5 + $0x14] sm:$0xf]
    %v129 = vld [vmem:[#allocation5 + $0x18] sm:$0xf]
    %v130 = vld [vmem:[#allocation5 + $0x1c] sm:$0xf]
    %v131 = vld [vmem:[#allocation5 + $0x20] sm:$0xf]
    %v132 = vld [vmem:[#allocation5 + $0x24] sm:$0xf]
    %v133 = vld [vmem:[#allocation5 + $0x28] sm:$0xf]
    %v134 = vld [vmem:[#allocation5 + $0x2c] sm:$0xf]
    %v135 = vld [vmem:[#allocation5 + $0x30] sm:$0xf]
    %v136 = vld [vmem:[#allocation5 + $0x34] sm:$0xf]
    %v137 = vld [vmem:[#allocation5 + $0x38] sm:$0xf]
    %v138 = vld [vmem:[#allocation5 + $0x3c] sm:$0xf]
    %v139 = vld [vmem:[%s2] sm:$0x1]
    %v141 = vperm.slane %v139, 0
    %v159 = vunpack.c.l.b16 %v123
    %v160 = vunpack.c.l.b16 %v124
    %v161 = vunpack.c.l.b16 %v125
    %v162 = vunpack.c.l.b16 %v126
    %v163 = vunpack.c.l.b16 %v127
    %v164 = vunpack.c.l.b16 %v128
    %v165 = vunpack.c.l.b16 %v129
    %v166 = vunpack.c.l.b16 %v130
    %v167 = vunpack.c.l.b16 %v131
    %v168 = vunpack.c.l.b16 %v132
    %v169 = vunpack.c.l.b16 %v133
    %v170 = vunpack.c.l.b16 %v134
    %v171 = vunpack.c.l.b16 %v135
    %v172 = vunpack.c.l.b16 %v136
    %v173 = vunpack.c.l.b16 %v137
    %v174 = vunpack.c.l.b16 %v138
    %v175 = vpack.c.b16 %v160, %v159
    %v176 = vpack.c.b16 %v162, %v161
    %v177 = vpack.c.b16 %v164, %v163
    %v178 = vpack.c.b16 %v166, %v165
    %v179 = vpack.c.b16 %v168, %v167
    %v180 = vpack.c.b16 %v170, %v169
    %v181 = vpack.c.b16 %v172, %v171
    %v182 = vpack.c.b16 %v174, %v173
    %191 = vmatpush.bf16.msra.mxu0 %v182
    %192 = vmatpush.bf16.msra.mxu0 %v181
    %193 = vmatpush.bf16.msra.mxu0 %v180
    %194 = vmatpush.bf16.msra.mxu0 %v179
    %195 = vmatpush.bf16.msra.mxu0 %v178
    %196 = vmatpush.bf16.msra.mxu0 %v177
    %197 = vmatpush.bf16.msra.mxu0 %v176
    %198 = vmatpush.bf16.msra.mxu0 %v175
    %199 = vmatmul.bf16.gmra.mxu0 %v122
    %v200 = vpop.f32.mrf.mxu0
    %v201 = vadd.f32 %v141, %v200
    %v202 = vpop.f32.mrf.mxu0
    %203 = vdwg.mxu0
    %vm204 = vcmp.gt.f32.partialorder %v201, 0.0
    %v205 = vmul.f32 %v201, 0.01
    %v206 = vsel %vm204, %v201, %v205
    %v207 = vpack.c.bf16 %v206, %v206
    %v208 = vld [vmem:[#allocation7] sm:$0xf]
    %v209 = vld [vmem:[#allocation7 + $0x4] sm:$0xf]
    %v210 = vld [vmem:[#allocation7 + $0x8] sm:$0xf]
    %v211 = vld [vmem:[#allocation7 + $0xc] sm:$0xf]
    %v212 = vld [vmem:[#allocation7 + $0x10] sm:$0xf]
    %v213 = vld [vmem:[#allocation7 + $0x14] sm:$0xf]
    %v214 = vld [vmem:[#allocation7 + $0x18] sm:$0xf]
    %v215 = vld [vmem:[#allocation7 + $0x1c] sm:$0xf]
    %v216 = vld [vmem:[#allocation7 + $0x20] sm:$0xf]
    %v217 = vld [vmem:[#allocation7 + $0x24] sm:$0xf]
    %v218 = vld [vmem:[#allocation7 + $0x28] sm:$0xf]
    %v219 = vld [vmem:[#allocation7 + $0x2c] sm:$0xf]
    %v220 = vld [vmem:[#allocation7 + $0x30] sm:$0xf]
    %v221 = vld [vmem:[#allocation7 + $0x34] sm:$0xf]
    %v222 = vld [vmem:[#allocation7 + $0x38] sm:$0xf]
    %v223 = vld [vmem:[#allocation7 + $0x3c] sm:$0xf]
    %v224 = vld [vmem:[%s4] sm:$0x1]
    %v226 = vperm.slane %v224, 0
    %v244 = vunpack.c.l.b16 %v208
    %v245 = vunpack.c.l.b16 %v209
    %v246 = vunpack.c.l.b16 %v210
    %v247 = vunpack.c.l.b16 %v211
    %v248 = vunpack.c.l.b16 %v212
    %v249 = vunpack.c.l.b16 %v213
    %v250 = vunpack.c.l.b16 %v214
    %v251 = vunpack.c.l.b16 %v215
    %v252 = vunpack.c.l.b16 %v216
    %v253 = vunpack.c.l.b16 %v217
    %v254 = vunpack.c.l.b16 %v218
    %v255 = vunpack.c.l.b16 %v219
    %v256 = vunpack.c.l.b16 %v220
    %v257 = vunpack.c.l.b16 %v221
    %v258 = vunpack.c.l.b16 %v222
    %v259 = vunpack.c.l.b16 %v223
    %v260 = vpack.c.b16 %v245, %v244
    %v261 = vpack.c.b16 %v247, %v246
    %v262 = vpack.c.b16 %v249, %v248
    %v263 = vpack.c.b16 %v251, %v250
    %v264 = vpack.c.b16 %v253, %v252
    %v265 = vpack.c.b16 %v255, %v254
    %v266 = vpack.c.b16 %v257, %v256
    %v267 = vpack.c.b16 %v259, %v258
    %276 = vmatpush.bf16.msra.mxu0 %v267
    %277 = vmatpush.bf16.msra.mxu0 %v266
    %278 = vmatpush.bf16.msra.mxu0 %v265
    %279 = vmatpush.bf16.msra.mxu0 %v264
    %280 = vmatpush.bf16.msra.mxu0 %v263
    %281 = vmatpush.bf16.msra.mxu0 %v262
    %282 = vmatpush.bf16.msra.mxu0 %v261
    %283 = vmatpush.bf16.msra.mxu0 %v260
    %284 = vmatmul.bf16.gmra.mxu0 %v207
    %v285 = vpop.f32.mrf.mxu0
    %v286 = vadd.f32 %v226, %v285
    %v287 = vpop.f32.mrf.mxu0
    %288 = vdwg.mxu0
    %vm289 = vcmp.gt.f32.partialorder %v286, 0.0
    %v290 = vmul.f32 %v286, 0.01
    %v291 = vsel %vm289, %v286, %v290
    %v292 = vpack.c.bf16 %v291, %v291
    %v293 = vld [vmem:[#allocation8] sm:$0xf]
    %v294 = vld [vmem:[#allocation8 + $0x4] sm:$0xf]
    %v295 = vld [vmem:[#allocation8 + $0x8] sm:$0xf]
    %v296 = vld [vmem:[#allocation8 + $0xc] sm:$0xf]
    %v297 = vld [vmem:[#allocation8 + $0x10] sm:$0xf]
    %v298 = vld [vmem:[#allocation8 + $0x14] sm:$0xf]
    %v299 = vld [vmem:[#allocation8 + $0x18] sm:$0xf]
    %v300 = vld [vmem:[#allocation8 + $0x1c] sm:$0xf]
    %v301 = vld [vmem:[#allocation8 + $0x20] sm:$0xf]
    %v302 = vld [vmem:[#allocation8 + $0x24] sm:$0xf]
    %v303 = vld [vmem:[#allocation8 + $0x28] sm:$0xf]
    %v304 = vld [vmem:[#allocation8 + $0x2c] sm:$0xf]
    %v305 = vld [vmem:[#allocation8 + $0x30] sm:$0xf]
    %v306 = vld [vmem:[#allocation8 + $0x34] sm:$0xf]
    %v307 = vld [vmem:[#allocation8 + $0x38] sm:$0xf]
    %v308 = vld [vmem:[#allocation8 + $0x3c] sm:$0xf]
    %v309 = vld [vmem:[%s6] sm:$0x1]
    %v311 = vperm.slane %v309, 0
    %v329 = vunpack.c.l.b16 %v293
    %v330 = vunpack.c.l.b16 %v294
    %v331 = vunpack.c.l.b16 %v295
    %v332 = vunpack.c.l.b16 %v296
    %v333 = vunpack.c.l.b16 %v297
    %v334 = vunpack.c.l.b16 %v298
    %v335 = vunpack.c.l.b16 %v299
    %v336 = vunpack.c.l.b16 %v300
    %v337 = vunpack.c.l.b16 %v301
    %v338 = vunpack.c.l.b16 %v302
    %v339 = vunpack.c.l.b16 %v303
    %v340 = vunpack.c.l.b16 %v304
    %v341 = vunpack.c.l.b16 %v305
    %v342 = vunpack.c.l.b16 %v306
    %v343 = vunpack.c.l.b16 %v307
    %v344 = vunpack.c.l.b16 %v308
    %v345 = vpack.c.b16 %v330, %v329
    %v346 = vpack.c.b16 %v332, %v331
    %v347 = vpack.c.b16 %v334, %v333
    %v348 = vpack.c.b16 %v336, %v335
    %v349 = vpack.c.b16 %v338, %v337
    %v350 = vpack.c.b16 %v340, %v339
    %v351 = vpack.c.b16 %v342, %v341
    %v352 = vpack.c.b16 %v344, %v343
    %361 = vmatpush.bf16.msra.mxu0 %v352
    %362 = vmatpush.bf16.msra.mxu0 %v351
    %363 = vmatpush.bf16.msra.mxu0 %v350
    %364 = vmatpush.bf16.msra.mxu0 %v349
    %365 = vmatpush.bf16.msra.mxu0 %v348
    %366 = vmatpush.bf16.msra.mxu0 %v347
    %367 = vmatpush.bf16.msra.mxu0 %v346
    %368 = vmatpush.bf16.msra.mxu0 %v345
    %369 = vmatmul.bf16.gmra.mxu0 %v292
    %v370 = vpop.f32.mrf.mxu0
    %v371 = vadd.f32 %v311, %v370
    %v372 = vpop.f32.mrf.mxu0
    %373 = vdwg.mxu0
    %374 = vst [vmem:[#allocation10] sm:$0xff] %v371
    // Predicated region
    $region46: #{tpu_custom_call.1} parent=1 // pred_check
      _
    $region47: #{tpu_custom_call.1} parent=1 // pred_check_branch
      %376 = sbr.rel (0) target = $region49
    $region48: #{tpu_custom_call.1} parent=1 // pred_region
      %378 = vsyncadd [#allocation4], 0
      %s380 = sshll.u32 [#allocation10], 4
      %s381 = int_to_ptr.vmem [resolvable:$true] %s380
      %s382 = sshll.u32 %s7, 4
      %s383 = int_to_ptr.hbm [resolvable:$true] %s382
      %385 = dma.vmem_to_hbm [thread:$0]  %s381, 128, %s383, [#allocation4]
    $region49: #{tpu_custom_call.1} parent=1 // pred_fallthru
      _
    // Predicated region
    $region50: #{tpu_custom_call.1} parent=1 // pred_check
      _
    $region51: #{tpu_custom_call.1} parent=1 // pred_check_branch
      %387 = sbr.rel (0) target = $region53
    $region52: #{tpu_custom_call.1} parent=1 // pred_region
      %389 = dma.done [#allocation4], 128
    $region53: #{tpu_custom_call.1} parent=1 // pred_fallthru
      _
    %390 = vsyncpa [#allocation3], 1
    %391 = vsyncpa [#allocation6], 1
    %392 = vsyncpa [#allocation9], 1
    %393 = vsyncpa [#allocation4], 1

</llo_original>
